<compile_context>
chip_gen: v7x
topology: tpu7x:2x2x1
jax: 0.10.0
libtpu: 0.0.40
codegen_flags: <defaults>
</compile_context>

<pallas_src>
import math

import jax
import jax.numpy as jnp
from jax.experimental import pallas as pl
from jax.experimental.pallas import tpu as pltpu

LANE = 128                     # TPU lane width; everything is padded to this.
BIAS_ROWS = 8                  # bias slab padded to 8 rows for sublane alignment
ROWS_PER_LAYER = LANE + BIAS_ROWS


# ------------------------------------------------------------------------------------
# Parameter construction (deterministic, mimics torch.nn.Linear uniform init bounds)
# ------------------------------------------------------------------------------------
def make_mlp_params(key, in_dim, hidden_dim, fc_num_layers, out_dim):
    """build_mlp: Linear(in,hid)+ReLU, (fc_num_layers-1)x[Linear(hid,hid)+ReLU], Linear(hid,out)."""
    dims = [in_dim] + [hidden_dim] * fc_num_layers + [out_dim]
    params = []
    for i in range(len(dims) - 1):
        key, kw, kb = jax.random.split(key, 3)
        bound = 1.0 / math.sqrt(dims[i])
        W = jax.random.uniform(kw, (dims[i], dims[i + 1]), jnp.float32, -bound, bound)
        b = jax.random.uniform(kb, (1, dims[i + 1]), jnp.float32, -bound, bound)
        params.append((W, b))
    return params, key


# ------------------------------------------------------------------------------------
# Host-side packing: one lane-dense parameter buffer + one constants buffer
# ------------------------------------------------------------------------------------
def pack_params(emb1_params, emb2_params, dense_params):
    """Fuse the two embedding MLPs block-diagonally and pack every layer into a single
    (n_layers_total * ROWS_PER_LAYER, 128) f32 buffer:
        rows [i*RPL,         i*RPL+128) : 128x128 zero-padded weight of layer i
        row   i*RPL+128                 : 1x128  zero-padded bias   of layer i
    Returns (packed_buffer, relu_flags)."""
    assert len(emb1_params) == len(emb2_params), "fusion needs equal embedding depth"
    layers = []
    relu_flags = []

    n_emb = len(emb1_params)
    for j, ((W1, b1), (W2, b2)) in enumerate(zip(emb1_params, emb2_params)):
        in1, out1 = W1.shape
        in2, out2 = W2.shape
        W = jnp.zeros((LANE, LANE), jnp.float32)
        W = W.at[:in1, :out1].set(W1)
        W = W.at[in1:in1 + in2, out1:out1 + out2].set(W2)
        b = jnp.zeros((1, LANE), jnp.float32)
        b = b.at[:, :out1].set(b1)
        b = b.at[:, out1:out1 + out2].set(b2)
        layers.append((W, b))
        relu_flags.append(j < n_emb - 1)          # no ReLU after embedding final layer

    n_dense = len(dense_params)
    for j, (Wd, bd) in enumerate(dense_params):
        in_d, out_d = Wd.shape
        W = jnp.zeros((LANE, LANE), jnp.float32).at[:in_d, :out_d].set(Wd)
        b = jnp.zeros((1, LANE), jnp.float32).at[:, :out_d].set(bd)
        layers.append((W, b))
        relu_flags.append(j < n_dense - 1)        # no ReLU after dense_net final layer

    buf = jnp.zeros((ROWS_PER_LAYER * len(layers), LANE), jnp.float32)
    for i, (W, b) in enumerate(layers):
        base = i * ROWS_PER_LAYER
        buf = buf.at[base:base + LANE, :].set(W)
        buf = buf.at[base + LANE:base + LANE + 1, :].set(b)
    return buf, tuple(relu_flags)


def pack_consts(grid1, grid2, inv_w2_1, inv_w2_2):
    """(8, 128) constants buffer:
        row 0: concatenated gaussian grids [grid1 | grid2 | 0...]
        row 1: per-lane 1/width^2          [inv1  | inv2  | 0...]
        row 2: lane selector (1.0 where the lane belongs to condition 1, else 0.0)"""
    G1, G2 = grid1.shape[1], grid2.shape[1]
    assert G1 + G2 <= LANE
    consts = jnp.zeros((8, LANE), jnp.float32)
    consts = consts.at[0, :G1].set(grid1[0])
    consts = consts.at[0, G1:G1 + G2].set(grid2[0])
    consts = consts.at[1, :G1].set(inv_w2_1)
    consts = consts.at[1, G1:G1 + G2].set(inv_w2_2)
    consts = consts.at[2, :G1].set(1.0)
    return consts


def pack_vals(val1, val2):
    """Lane-dense (B, 128) scalar-condition buffer: lane 0 = cond1 value, lane 1 = cond2."""
    B = val1.shape[0]
    vals = jnp.zeros((B, LANE), jnp.float32)
    vals = vals.at[:, 0:1].set(val1)
    vals = vals.at[:, 1:2].set(val2)
    return vals


# ------------------------------------------------------------------------------------
# Pallas kernel
# ------------------------------------------------------------------------------------
def conditioning_forward_pallas(vals, consts, packed_params, relu_flags, n_out,
                                batch_tile=None):
    """Fused forward. `vals` is (B,128) lane-dense (lanes 0/1 carry the two scalar
    conditions), `consts` (8,128), `packed_params` (n_layers*136, 128).
    Returns (B, n_out)."""
    B = vals.shape[0]

    def kernel(vals_ref, consts_ref, params_ref, out_ref):
        grid_row = consts_ref[0:1, :]          # (1,128) fused gaussian grid
        invw_row = consts_ref[1:2, :]          # (1,128) fused 1/width^2
        sel_row = consts_ref[2:3, :]           # (1,128) lane -> which condition

        v1 = vals_ref[:, 0:1]                  # (Bt,1) condition 1 value
        v2 = vals_ref[:, 1:2]                  # (Bt,1) condition 2 value
        v = jnp.where(sel_row > 0.5, v1, v2)   # (Bt,128) per-lane scalar value

        # Fused Gaussian basis expansion of both conditions (EUP exp, free slot).
        # Padding lanes (>= G1+G2) are harmless: the matching weight rows are zero.
        x = jnp.exp(-((v - grid_row) ** 2) * invw_row)     # (Bt,128)

        # Fused block-diagonal embedding MLPs followed by dense_net, all lane-dense.
        for li, relu in enumerate(relu_flags):
            base = li * ROWS_PER_LAYER
            W = params_ref[base:base + LANE, :]                # (128,128) static slice
            b = params_ref[base + LANE:base + LANE + 1, :]     # (1,128)
            x = jnp.dot(x, W, preferred_element_type=jnp.float32) + b
            if relu:
                x = jnp.maximum(x, 0.0)

        out_ref[...] = x

    if batch_tile is None or batch_tile >= B:
        # Small-batch path: no grid, whole arrays resident in VMEM, single DMA each.
        out = pl.pallas_call(
            kernel,
            out_shape=jax.ShapeDtypeStruct((B, LANE), jnp.float32),
            in_specs=[pl.BlockSpec(memory_space=pltpu.MemorySpace.VMEM)] * 3,
            out_specs=pl.BlockSpec(memory_space=pltpu.MemorySpace.VMEM),
        )(vals, consts, packed_params)
    else:
        # Large-batch path: tile the batch and mark it "parallel" (megacore on v7x).
        assert B % batch_tile == 0, "batch must be a multiple of batch_tile"
        out = pl.pallas_call(
            kernel,
            out_shape=jax.ShapeDtypeStruct((B, LANE), jnp.float32),
            grid=(B // batch_tile,),
            in_specs=[
                pl.BlockSpec((batch_tile, LANE), lambda i: (i, 0)),
                pl.BlockSpec(consts.shape, lambda i: (0, 0)),
                pl.BlockSpec(packed_params.shape, lambda i: (0, 0)),
            ],
            out_specs=pl.BlockSpec((batch_tile, LANE), lambda i: (i, 0)),
            compiler_params=pltpu.CompilerParams(
                dimension_semantics=("parallel",)),
        )(vals, consts, packed_params)

    return out[:, :n_out]


# ------------------------------------------------------------------------------------
# Pure-JAX reference for correctness checking (unfused, unpadded)
# ------------------------------------------------------------------------------------
def conditioning_forward_ref(val1, val2, grid1, grid2,
                             emb1_params, emb2_params, dense_params,
                             inv_w2_1, inv_w2_2):
    def mlp(x, params):
        for i, (W, b) in enumerate(params):
            x = x @ W + b
            if i < len(params) - 1:
                x = jnp.maximum(x, 0.0)
        return x

    g1 = jnp.exp(-((val1 - grid1) ** 2) * inv_w2_1)
    g2 = jnp.exp(-((val2 - grid2) ** 2) * inv_w2_2)
    e1 = mlp(g1, emb1_params)
    e2 = mlp(g2, emb2_params)
    feat = jnp.concatenate([e1, e2], axis=-1)
    return mlp(feat, dense_params)


# ------------------------------------------------------------------------------------
if __name__ == "__main__":
    key = jax.random.PRNGKey(0)

    # ---- module configuration (small, consistent with the module's __init__) ----
    B = 8                      # batch
    G1, G2 = 16, 12            # gaussian-grid sizes of the two condition embeddings
    EMB1_NF, EMB2_NF = 8, 8    # per-embedding n_features
    EMB_LAYERS = 2             # fc_num_layers inside each condition embedding's MLP
    N_IN = EMB1_NF + EMB2_NF   # concatenated embedding width
    N_FEATURES = 32            # ConditioningModule.n_features
    N_LAYERS = 3               # ConditioningModule n_layers (dense_net fc_num_layers)

    # gaussian grids for the two scalar conditions (e.g. formation_energy, band_gap)
    c1_min, c1_max = -5.0, 2.0
    c2_min, c2_max = 0.0, 8.0
    grid1 = jnp.linspace(c1_min, c1_max, G1, dtype=jnp.float32).reshape(1, G1)
    grid2 = jnp.linspace(c2_min, c2_max, G2, dtype=jnp.float32).reshape(1, G2)
    spacing1 = (c1_max - c1_min) / (G1 - 1)
    spacing2 = (c2_max - c2_min) / (G2 - 1)
    inv_w2_1 = float(1.0 / (spacing1 ** 2))
    inv_w2_2 = float(1.0 / (spacing2 ** 2))

    # ---- deterministic parameters ----
    emb1_params, key = make_mlp_params(key, G1, EMB1_NF, EMB_LAYERS, EMB1_NF)
    emb2_params, key = make_mlp_params(key, G2, EMB2_NF, EMB_LAYERS, EMB2_NF)
    dense_params, key = make_mlp_params(key, N_IN, N_FEATURES, N_LAYERS, N_FEATURES)

    # ---- host-side packing: one lane-dense parameter buffer, one constants buffer ----
    packed_params, relu_flags = pack_params(emb1_params, emb2_params, dense_params)
    consts = pack_consts(grid1, grid2, inv_w2_1, inv_w2_2)

    # ---- example inputs: dict of scalar condition values, one per sample ----
    key, k1, k2 = jax.random.split(key, 3)
    inputs = {
        "formation_energy_per_atom": jax.random.uniform(k1, (B, 1), jnp.float32, c1_min, c1_max),
        "band_gap": jax.random.uniform(k2, (B, 1), jnp.float32, c2_min, c2_max),
    }
    vals = pack_vals(inputs["formation_energy_per_atom"], inputs["band_gap"])

    # ---- small-batch (gridless) path ----
    out = conditioning_forward_pallas(vals, consts, packed_params, relu_flags, N_FEATURES)
    out = jax.block_until_ready(out)

    ref = conditioning_forward_ref(
        inputs["formation_energy_per_atom"], inputs["band_gap"],
        grid1, grid2, emb1_params, emb2_params, dense_params,
        inv_w2_1, inv_w2_2)

    assert out.shape == (B, N_FEATURES)
    assert jnp.allclose(out, ref, atol=1e-4, rtol=1e-4), "Pallas output mismatch vs reference"

    # ---- batch-tiled "parallel" path (megacore split on v7x for large batches) ----
    B_BIG, B_TILE = 256, 128
    key, k3, k4 = jax.random.split(key, 3)
    val1_big = jax.random.uniform(k3, (B_BIG, 1), jnp.float32, c1_min, c1_max)
    val2_big = jax.random.uniform(k4, (B_BIG, 1), jnp.float32, c2_min, c2_max)
    vals_big = pack_vals(val1_big, val2_big)

    out_big = conditioning_forward_pallas(vals_big, consts, packed_params, relu_flags,
                                          N_FEATURES, batch_tile=B_TILE)
    out_big = jax.block_until_ready(out_big)
    ref_big = conditioning_forward_ref(val1_big, val2_big, grid1, grid2,
                                       emb1_params, emb2_params, dense_params,
                                       inv_w2_1, inv_w2_2)
    assert out_big.shape == (B_BIG, N_FEATURES)
    assert jnp.allclose(out_big, ref_big, atol=1e-4, rtol=1e-4), "Pallas (tiled) mismatch vs reference"

    print("KERNEL_OK")
</pallas_src>

<mosaic_0001>
module attributes {stable_mosaic.version = 11 : i64} {
  func.func @kernel(%arg0: memref<8x128xf32, #tpu.memory_space<vmem>>, %arg1: memref<8x128xf32, #tpu.memory_space<vmem>>, %arg2: memref<952x128xf32, #tpu.memory_space<vmem>>, %arg3: memref<8x128xf32, #tpu.memory_space<vmem>>) attributes {dimension_semantics = [], scalar_prefetch = 0 : i64, scratch_operands = 0 : i64, tpu.core_type = #tpu.core_type<tc>} {
    %c0 = arith.constant 0 : index
    %c0_0 = arith.constant 0 : index
    %0 = vector.load %arg1[%c0, %c0_0] : memref<8x128xf32, #tpu.memory_space<vmem>>, vector<1x128xf32>
    %c1 = arith.constant 1 : index
    %c0_1 = arith.constant 0 : index
    %1 = vector.load %arg1[%c1, %c0_1] : memref<8x128xf32, #tpu.memory_space<vmem>>, vector<1x128xf32>
    %c2 = arith.constant 2 : index
    %c0_2 = arith.constant 0 : index
    %2 = vector.load %arg1[%c2, %c0_2] : memref<8x128xf32, #tpu.memory_space<vmem>>, vector<1x128xf32>
    %c0_3 = arith.constant 0 : index
    %c0_4 = arith.constant 0 : index
    %3 = vector.load %arg0[%c0_3, %c0_4] : memref<8x128xf32, #tpu.memory_space<vmem>>, vector<8x1xf32>
    %c0_5 = arith.constant 0 : index
    %c1_6 = arith.constant 1 : index
    %4 = vector.load %arg0[%c0_5, %c1_6] : memref<8x128xf32, #tpu.memory_space<vmem>>, vector<8x1xf32>
    %cst = arith.constant 5.000000e-01 : f32
    %5 = vector.broadcast %cst : f32 to vector<1x128xf32>
    %6 = arith.cmpf ogt, %2, %5 : vector<1x128xf32>
    %7 = vector.shape_cast %6 : vector<1x128xi1> to vector<1x128xi1>
    %8 = vector.broadcast %7 : vector<1x128xi1> to vector<8x128xi1>
    %9 = vector.shape_cast %3 : vector<8x1xf32> to vector<8x1xf32>
    %10 = vector.broadcast %9 : vector<8x1xf32> to vector<8x128xf32>
    %11 = vector.shape_cast %4 : vector<8x1xf32> to vector<8x1xf32>
    %12 = vector.broadcast %11 : vector<8x1xf32> to vector<8x128xf32>
    %13 = arith.select %8, %10, %12 : vector<8x128xi1>, vector<8x128xf32>
    %14 = vector.broadcast %0 : vector<1x128xf32> to vector<8x128xf32>
    %15 = arith.subf %13, %14 : vector<8x128xf32>
    %16 = arith.mulf %15, %15 : vector<8x128xf32>
    %cst_7 = arith.constant 0.000000e+00 : f32
    %17 = vector.broadcast %cst_7 : f32 to vector<8x128xf32>
    %18 = arith.subf %17, %16 : vector<8x128xf32>
    %19 = vector.broadcast %1 : vector<1x128xf32> to vector<8x128xf32>
    %20 = arith.mulf %18, %19 : vector<8x128xf32>
    %21 = math.exp %20 : vector<8x128xf32>
    %c0_8 = arith.constant 0 : index
    %c0_9 = arith.constant 0 : index
    %22 = vector.load %arg2[%c0_8, %c0_9] : memref<952x128xf32, #tpu.memory_space<vmem>>, vector<128x128xf32>
    %c128 = arith.constant 128 : index
    %c0_10 = arith.constant 0 : index
    %23 = vector.load %arg2[%c128, %c0_10] : memref<952x128xf32, #tpu.memory_space<vmem>>, vector<1x128xf32>
    %cst_11 = arith.constant dense<0.000000e+00> : vector<8x128xf32>
    %24 = tpu.matmul %21, %22, %cst_11 {dimension_numbers = #tpu.dot_dimension_numbers<[1], [0], [0], [1], [0, 0, 1, 1], [], []>} : vector<8x128xf32>, vector<128x128xf32>, vector<8x128xf32> -> vector<8x128xf32>
    %25 = vector.broadcast %23 : vector<1x128xf32> to vector<8x128xf32>
    %26 = arith.addf %24, %25 : vector<8x128xf32>
    %cst_12 = arith.constant 0.000000e+00 : f32
    %27 = vector.broadcast %cst_12 : f32 to vector<8x128xf32>
    %28 = arith.maximumf %26, %27 : vector<8x128xf32>
    %c136 = arith.constant 136 : index
    %c0_13 = arith.constant 0 : index
    %29 = vector.load %arg2[%c136, %c0_13] : memref<952x128xf32, #tpu.memory_space<vmem>>, vector<128x128xf32>
    %c264 = arith.constant 264 : index
    %c0_14 = arith.constant 0 : index
    %30 = vector.load %arg2[%c264, %c0_14] : memref<952x128xf32, #tpu.memory_space<vmem>>, vector<1x128xf32>
    %cst_15 = arith.constant dense<0.000000e+00> : vector<8x128xf32>
    %31 = tpu.matmul %28, %29, %cst_15 {dimension_numbers = #tpu.dot_dimension_numbers<[1], [0], [0], [1], [0, 0, 1, 1], [], []>} : vector<8x128xf32>, vector<128x128xf32>, vector<8x128xf32> -> vector<8x128xf32>
    %32 = vector.broadcast %30 : vector<1x128xf32> to vector<8x128xf32>
    %33 = arith.addf %31, %32 : vector<8x128xf32>
    %cst_16 = arith.constant 0.000000e+00 : f32
    %34 = vector.broadcast %cst_16 : f32 to vector<8x128xf32>
    %35 = arith.maximumf %33, %34 : vector<8x128xf32>
    %c272 = arith.constant 272 : index
    %c0_17 = arith.constant 0 : index
    %36 = vector.load %arg2[%c272, %c0_17] : memref<952x128xf32, #tpu.memory_space<vmem>>, vector<128x128xf32>
    %c400 = arith.constant 400 : index
    %c0_18 = arith.constant 0 : index
    %37 = vector.load %arg2[%c400, %c0_18] : memref<952x128xf32, #tpu.memory_space<vmem>>, vector<1x128xf32>
    %cst_19 = arith.constant dense<0.000000e+00> : vector<8x128xf32>
    %38 = tpu.matmul %35, %36, %cst_19 {dimension_numbers = #tpu.dot_dimension_numbers<[1], [0], [0], [1], [0, 0, 1, 1], [], []>} : vector<8x128xf32>, vector<128x128xf32>, vector<8x128xf32> -> vector<8x128xf32>
    %39 = vector.broadcast %37 : vector<1x128xf32> to vector<8x128xf32>
    %40 = arith.addf %38, %39 : vector<8x128xf32>
    %c408 = arith.constant 408 : index
    %c0_20 = arith.constant 0 : index
    %41 = vector.load %arg2[%c408, %c0_20] : memref<952x128xf32, #tpu.memory_space<vmem>>, vector<128x128xf32>
    %c536 = arith.constant 536 : index
    %c0_21 = arith.constant 0 : index
    %42 = vector.load %arg2[%c536, %c0_21] : memref<952x128xf32, #tpu.memory_space<vmem>>, vector<1x128xf32>
    %cst_22 = arith.constant dense<0.000000e+00> : vector<8x128xf32>
    %43 = tpu.matmul %40, %41, %cst_22 {dimension_numbers = #tpu.dot_dimension_numbers<[1], [0], [0], [1], [0, 0, 1, 1], [], []>} : vector<8x128xf32>, vector<128x128xf32>, vector<8x128xf32> -> vector<8x128xf32>
    %44 = vector.broadcast %42 : vector<1x128xf32> to vector<8x128xf32>
    %45 = arith.addf %43, %44 : vector<8x128xf32>
    %cst_23 = arith.constant 0.000000e+00 : f32
    %46 = vector.broadcast %cst_23 : f32 to vector<8x128xf32>
    %47 = arith.maximumf %45, %46 : vector<8x128xf32>
    %c544 = arith.constant 544 : index
    %c0_24 = arith.constant 0 : index
    %48 = vector.load %arg2[%c544, %c0_24] : memref<952x128xf32, #tpu.memory_space<vmem>>, vector<128x128xf32>
    %c672 = arith.constant 672 : index
    %c0_25 = arith.constant 0 : index
    %49 = vector.load %arg2[%c672, %c0_25] : memref<952x128xf32, #tpu.memory_space<vmem>>, vector<1x128xf32>
    %cst_26 = arith.constant dense<0.000000e+00> : vector<8x128xf32>
    %50 = tpu.matmul %47, %48, %cst_26 {dimension_numbers = #tpu.dot_dimension_numbers<[1], [0], [0], [1], [0, 0, 1, 1], [], []>} : vector<8x128xf32>, vector<128x128xf32>, vector<8x128xf32> -> vector<8x128xf32>
    %51 = vector.broadcast %49 : vector<1x128xf32> to vector<8x128xf32>
    %52 = arith.addf %50, %51 : vector<8x128xf32>
    %cst_27 = arith.constant 0.000000e+00 : f32
    %53 = vector.broadcast %cst_27 : f32 to vector<8x128xf32>
    %54 = arith.maximumf %52, %53 : vector<8x128xf32>
    %c680 = arith.constant 680 : index
    %c0_28 = arith.constant 0 : index
    %55 = vector.load %arg2[%c680, %c0_28] : memref<952x128xf32, #tpu.memory_space<vmem>>, vector<128x128xf32>
    %c808 = arith.constant 808 : index
    %c0_29 = arith.constant 0 : index
    %56 = vector.load %arg2[%c808, %c0_29] : memref<952x128xf32, #tpu.memory_space<vmem>>, vector<1x128xf32>
    %cst_30 = arith.constant dense<0.000000e+00> : vector<8x128xf32>
    %57 = tpu.matmul %54, %55, %cst_30 {dimension_numbers = #tpu.dot_dimension_numbers<[1], [0], [0], [1], [0, 0, 1, 1], [], []>} : vector<8x128xf32>, vector<128x128xf32>, vector<8x128xf32> -> vector<8x128xf32>
    %58 = vector.broadcast %56 : vector<1x128xf32> to vector<8x128xf32>
    %59 = arith.addf %57, %58 : vector<8x128xf32>
    %cst_31 = arith.constant 0.000000e+00 : f32
    %60 = vector.broadcast %cst_31 : f32 to vector<8x128xf32>
    %61 = arith.maximumf %59, %60 : vector<8x128xf32>
    %c816 = arith.constant 816 : index
    %c0_32 = arith.constant 0 : index
    %62 = vector.load %arg2[%c816, %c0_32] : memref<952x128xf32, #tpu.memory_space<vmem>>, vector<128x128xf32>
    %c944 = arith.constant 944 : index
    %c0_33 = arith.constant 0 : index
    %63 = vector.load %arg2[%c944, %c0_33] : memref<952x128xf32, #tpu.memory_space<vmem>>, vector<1x128xf32>
    %cst_34 = arith.constant dense<0.000000e+00> : vector<8x128xf32>
    %64 = tpu.matmul %61, %62, %cst_34 {dimension_numbers = #tpu.dot_dimension_numbers<[1], [0], [0], [1], [0, 0, 1, 1], [], []>} : vector<8x128xf32>, vector<128x128xf32>, vector<8x128xf32> -> vector<8x128xf32>
    %65 = vector.broadcast %63 : vector<1x128xf32> to vector<8x128xf32>
    %66 = arith.addf %64, %65 : vector<8x128xf32>
    %c0_35 = arith.constant 0 : index
    %c0_36 = arith.constant 0 : index
    %67 = vector.load %arg3[%c0_35, %c0_36] : memref<8x128xf32, #tpu.memory_space<vmem>>, vector<8x128xf32>
    tpu.vector_store %arg3[%c0_35, %c0_36], %66 {strides = array<i32>} : memref<8x128xf32, #tpu.memory_space<vmem>>, vector<8x128xf32>,
    return
  }
}

</mosaic_0001>

<llo_original>
// kernel: tpu_custom_call.1
$region0: #{tpu_custom_call.1}
  #allocation0 [shape = 'u32[]', space=smem, size = 0x4, offset = 0x4, fixed_abs, tag = 'smem constant byte address 0x4 - core index']
  #allocation1 [shape = 'u32[144,128]{1,0:T(1,128)}', space=vmem, size = 0x12000, scoped, tag = 'internal scratch']
  %s0 = inlined_call_operand.hbm [shape: f32[8,128], index: 0, kind: input, shape index: {}]
  %s1 = inlined_call_operand.hbm [shape: f32[8,128], index: 1, kind: input, shape index: {}]
  %s2 = inlined_call_operand.hbm [shape: f32[952,128], index: 2, kind: input, shape index: {}]
  %s3 = inlined_call_operand.hbm [shape: f32[8,128], index: 3, kind: output, shape index: {}]
  %s4 = sld [smem:[#allocation0]]
  $region34: #{tpu_custom_call.1} parent=0
    _
  %s6 = ssub.s32 1, %s4
  %s7 = scalar_select 0, %s6, %s4
  $region1: #{tpu_custom_call.1} parent=0
    #allocation2 [shape = 'u8[4096]{0}', space=vmem, size = 0x1000, scoped, tag = 'input window, operand 0, single buffered']
    #allocation3 [shape = 's32[1]{0}', space=sflag, size = 0x4, scoped, tag = 'scoped memory for tpu_custom_call.1']
    #allocation4 [shape = 's32[1]{0}', space=sflag, size = 0x4, scoped, tag = 'scoped memory for tpu_custom_call.1']
    #allocation5 [shape = 'u8[4096]{0}', space=vmem, size = 0x1000, scoped, tag = 'input window, operand 1, single buffered']
    #allocation6 [shape = 's32[1]{0}', space=sflag, size = 0x4, scoped, tag = 'scoped memory for tpu_custom_call.1']
    #allocation7 [shape = 'u8[487424]{0}', space=vmem, size = 0x77000, scoped, tag = 'input window, operand 2, single buffered']
    #allocation8 [shape = 'u8[4096]{0}', space=vmem, size = 0x1000, scoped, tag = 'output window, operand 0, single buffered']
    %8 = vsyncpa [#allocation3], 0
    %9 = vsyncpa [#allocation6], 0
    %10 = vsyncpa [#allocation4], 0
    // Predicated region
    $region2: #{tpu_custom_call.1} parent=1 // pred_check
      _
    $region3: #{tpu_custom_call.1} parent=1 // pred_check_branch
      %12 = sbr.rel (0) target = $region5
    $region4: #{tpu_custom_call.1} parent=1 // pred_region
      %s14 = ssub.s32 128, 128
      %15 = vsyncadd [#allocation3], %s14
      %s17 = sshll.u32 [#allocation2], 4
      %s18 = int_to_ptr.vmem [resolvable:$true] %s17
      %20 = dma.hbm_to_vmem [thread:$0]  %s0, 128, %s18, [#allocation3]
    $region5: #{tpu_custom_call.1} parent=1 // pred_fallthru
      _
    // Predicated region
    $region6: #{tpu_custom_call.1} parent=1 // pred_check
      _
    $region7: #{tpu_custom_call.1} parent=1 // pred_check_branch
      %22 = sbr.rel (0) target = $region9
    $region8: #{tpu_custom_call.1} parent=1 // pred_region
      %s24 = ssub.s32 128, 128
      %25 = vsyncadd [#allocation6], %s24
      %s27 = sshll.u32 [#allocation5], 4
      %s28 = int_to_ptr.vmem [resolvable:$true] %s27
      %30 = dma.hbm_to_vmem [thread:$0]  %s1, 128, %s28, [#allocation6]
    $region9: #{tpu_custom_call.1} parent=1 // pred_fallthru
      _
    // Predicated region
    $region10: #{tpu_custom_call.1} parent=1 // pred_check
      _
    $region11: #{tpu_custom_call.1} parent=1 // pred_check_branch
      %32 = sbr.rel (0) target = $region13
    $region12: #{tpu_custom_call.1} parent=1 // pred_region
      %s34 = ssub.s32 15232, 15232
      %35 = vsyncadd [#allocation6], %s34
      %s36 = sshll.u32 [#allocation7], 4
      %s37 = int_to_ptr.vmem [resolvable:$true] %s36
      %42 = dma.hbm_to_vmem [thread:$0]  %s2, 15232, %s37, [#allocation6], 128, 128, 8
    $region13: #{tpu_custom_call.1} parent=1 // pred_fallthru
      _
    // Predicated region
    $region14: #{tpu_custom_call.1} parent=1 // pred_check
      _
    $region15: #{tpu_custom_call.1} parent=1 // pred_check_branch
      %44 = sbr.rel (0) target = $region17
    $region16: #{tpu_custom_call.1} parent=1 // pred_region
      %45 = dma.done [#allocation3], 128
    $region17: #{tpu_custom_call.1} parent=1 // pred_fallthru
      _
    // Predicated region
    $region18: #{tpu_custom_call.1} parent=1 // pred_check
      _
    $region19: #{tpu_custom_call.1} parent=1 // pred_check_branch
      %47 = sbr.rel (0) target = $region21
    $region20: #{tpu_custom_call.1} parent=1 // pred_region
      %48 = dma.done [#allocation6], 128
    $region21: #{tpu_custom_call.1} parent=1 // pred_fallthru
      _
    // Predicated region
    $region22: #{tpu_custom_call.1} parent=1 // pred_check
      _
    $region23: #{tpu_custom_call.1} parent=1 // pred_check_branch
      %50 = sbr.rel (0) target = $region25
    $region24: #{tpu_custom_call.1} parent=1 // pred_region
      %51 = dma.done [#allocation6], 15232
    $region25: #{tpu_custom_call.1} parent=1 // pred_fallthru
      _
    %v52 = vld [vmem:[#allocation5] sm:$0x1]
    %v53 = vld [vmem:[#allocation5 + $0x1] sm:$0x1]
    %v54 = vld [vmem:[#allocation5 + $0x2] sm:$0x1]
    %v55 = vld [vmem:[#allocation2] sm:$0xff]
    %vm56 = vcmp.gt.f32.partialorder %v54, 0.5
    %v57 = vsel %vm56, 1, 0
    %v58 = vlaneseq
    %v59 = vshrl.u32 %v58, 7
    %v60 = vsub.s32 0, %v59
    %v61 = vrot.slane %v57, %v60
    %vm62 = vcmp.eq.s32.totalorder %v61, 1
    %64 = vset.pattern.permute.xlu0 0
    %65 = vperm.xlu0 %64, %v55
    %v66 = vpop.permute.xlu0 %65
    %68 = vset.pattern.permute.xlu0 1
    %69 = vperm.xlu0 %68, %v55
    %v70 = vpop.permute.xlu0 %69
    %v72 = vsel %vm62, %v66, %v70
    %v73 = vlaneseq
    %v74 = vshrl.u32 %v73, 7
    %v75 = vsub.s32 0, %v74
    %v76 = vrot.slane %v52, %v75
    %v77 = vsub.f32 %v72, %v76
    %v78 = vmul.f32 %v77, %v77
    %v79 = vsub.f32 0.0, %v78
    %v80 = vlaneseq
    %v81 = vshrl.u32 %v80, 7
    %v82 = vsub.s32 0, %v81
    %v83 = vrot.slane %v53, %v82
    %v84 = vmul.f32 %v79, %v83
    %v85 = vmul.f32 %v84, 1.442695
    %v86 = vpow.pop %v85
    %v87 = vld [vmem:[#allocation7] sm:$0xff]
    %v88 = vld [vmem:[#allocation7 + $0x8] sm:$0xff]
    %v89 = vld [vmem:[#allocation7 + $0x10] sm:$0xff]
    %v90 = vld [vmem:[#allocation7 + $0x18] sm:$0xff]
    %v91 = vld [vmem:[#allocation7 + $0x20] sm:$0xff]
    %v92 = vld [vmem:[#allocation7 + $0x28] sm:$0xff]
    %v93 = vld [vmem:[#allocation7 + $0x30] sm:$0xff]
    %v94 = vld [vmem:[#allocation7 + $0x38] sm:$0xff]
    %v95 = vld [vmem:[#allocation7 + $0x40] sm:$0xff]
    %v96 = vld [vmem:[#allocation7 + $0x48] sm:$0xff]
    %v97 = vld [vmem:[#allocation7 + $0x50] sm:$0xff]
    %v98 = vld [vmem:[#allocation7 + $0x58] sm:$0xff]
    %v99 = vld [vmem:[#allocation7 + $0x60] sm:$0xff]
    %v100 = vld [vmem:[#allocation7 + $0x68] sm:$0xff]
    %v101 = vld [vmem:[#allocation7 + $0x70] sm:$0xff]
    %v102 = vld [vmem:[#allocation7 + $0x78] sm:$0xff]
    %v103 = vld [vmem:[#allocation7 + $0x80] sm:$0x1]
    %v104 = vlaneseq
    %v105 = vshrl.u32 %v104, 7
    %v106 = vsub.s32 0, %v105
    %v107 = vrot.slane %v103, %v106
    %108 = vmatprep.subr.mxu0 0.0
    %109 = vmatpush1.msra.mxu0 %v87
    %110 = vmatprep.subr.mxu0 0.0
    %111 = vmatpush1.msra.mxu0 %v88
    %112 = vmatprep.subr.mxu0 0.0
    %113 = vmatpush1.msra.mxu0 %v89
    %114 = vmatprep.subr.mxu0 0.0
    %115 = vmatpush1.msra.mxu0 %v90
    %116 = vmatprep.subr.mxu0 0.0
    %117 = vmatpush1.msra.mxu0 %v91
    %118 = vmatprep.subr.mxu0 0.0
    %119 = vmatpush1.msra.mxu0 %v92
    %120 = vmatprep.subr.mxu0 0.0
    %121 = vmatpush1.msra.mxu0 %v93
    %122 = vmatprep.subr.mxu0 0.0
    %123 = vmatpush1.msra.mxu0 %v94
    %124 = vmatprep.subr.mxu0 0.0
    %125 = vmatpush1.msra.mxu0 %v95
    %126 = vmatprep.subr.mxu0 0.0
    %127 = vmatpush1.msra.mxu0 %v96
    %128 = vmatprep.subr.mxu0 0.0
    %129 = vmatpush1.msra.mxu0 %v97
    %130 = vmatprep.subr.mxu0 0.0
    %131 = vmatpush1.msra.mxu0 %v98
    %132 = vmatprep.subr.mxu0 0.0
    %133 = vmatpush1.msra.mxu0 %v99
    %134 = vmatprep.subr.mxu0 0.0
    %135 = vmatpush1.msra.mxu0 %v100
    %136 = vmatprep.subr.mxu0 0.0
    %137 = vmatpush1.msra.mxu0 %v101
    %138 = vmatprep.subr.mxu0 0.0
    %139 = vmatpush1.msra.mxu0 %v102
    %140 = vmatprep.subr.mxu0 0.0
    %141 = vmatpush1.msra.mxu0 0.0
    %142 = vmatprep.subr.mxu0 0.0
    %143 = vmatpush1.msra.mxu0 0.0
    %144 = vmatprep.subr.mxu0 0.0
    %145 = vmatpush1.msra.mxu0 0.0
    %146 = vmatprep.subr.mxu0 0.0
    %147 = vmatpush1.msra.mxu0 0.0
    %148 = vmatprep.subr.mxu0 0.0
    %149 = vmatpush1.msra.mxu0 0.0
    %150 = vmatprep.subr.mxu0 0.0
    %151 = vmatpush1.msra.mxu0 0.0
    %152 = vmatprep.subr.mxu0 0.0
    %153 = vmatpush1.msra.mxu0 0.0
    %154 = vmatprep.subr.mxu0 0.0
    %155 = vmatpush1.msra.mxu0 0.0
    %156 = vmatprep.subr.mxu0 0.0
    %157 = vmatpush1.msra.mxu0 0.0
    %158 = vmatprep.subr.mxu0 0.0
    %159 = vmatpush1.msra.mxu0 0.0
    %160 = vmatprep.subr.mxu0 0.0
    %161 = vmatpush1.msra.mxu0 0.0
    %162 = vmatprep.subr.mxu0 0.0
    %163 = vmatpush1.msra.mxu0 0.0
    %164 = vmatprep.subr.mxu0 0.0
    %165 = vmatpush1.msra.mxu0 0.0
    %166 = vmatprep.subr.mxu0 0.0
    %167 = vmatpush1.msra.mxu0 0.0
    %168 = vmatprep.subr.mxu0 0.0
    %169 = vmatpush1.msra.mxu0 0.0
    %170 = vmatprep.subr.mxu0 0.0
    %171 = vmatpush1.msra.mxu0 0.0
    %172 = vmatprep.mubr.f32.mxu0 0.0
    %173 = vmatmul.mubr.f32.gmra.mrb[0].mxu0 %v86
    %v174 = vpop.f32.mrb[0].mxu0
    %v175 = vadd.f32 %v107, %v174
    %v176 = vpop.f32.mrb[0].mxu0
    %177 = vdwg.mxu0
    %v178 = vmax.f32 %v175, 0.0
    %v179 = vld [vmem:[#allocation7 + $0x88] sm:$0xff]
    %v180 = vld [vmem:[#allocation7 + $0x90] sm:$0xff]
    %v181 = vld [vmem:[#allocation7 + $0x98] sm:$0xff]
    %v182 = vld [vmem:[#allocation7 + $0xa0] sm:$0xff]
    %v183 = vld [vmem:[#allocation7 + $0xa8] sm:$0xff]
    %v184 = vld [vmem:[#allocation7 + $0xb0] sm:$0xff]
    %v185 = vld [vmem:[#allocation7 + $0xb8] sm:$0xff]
    %v186 = vld [vmem:[#allocation7 + $0xc0] sm:$0xff]
    %v187 = vld [vmem:[#allocation7 + $0xc8] sm:$0xff]
    %v188 = vld [vmem:[#allocation7 + $0xd0] sm:$0xff]
    %v189 = vld [vmem:[#allocation7 + $0xd8] sm:$0xff]
    %v190 = vld [vmem:[#allocation7 + $0xe0] sm:$0xff]
    %v191 = vld [vmem:[#allocation7 + $0xe8] sm:$0xff]
    %v192 = vld [vmem:[#allocation7 + $0xf0] sm:$0xff]
    %v193 = vld [vmem:[#allocation7 + $0xf8] sm:$0xff]
    %v194 = vld [vmem:[#allocation7 + $0x100] sm:$0xff]
    %v195 = vld [vmem:[#allocation7 + $0x108] sm:$0x1]
    %v196 = vlaneseq
    %v197 = vshrl.u32 %v196, 7
    %v198 = vsub.s32 0, %v197
    %v199 = vrot.slane %v195, %v198
    %200 = vmatprep.subr.mxu0 0.0
    %201 = vmatpush1.msra.mxu0 %v179
    %202 = vmatprep.subr.mxu0 0.0
    %203 = vmatpush1.msra.mxu0 %v180
    %204 = vmatprep.subr.mxu0 0.0
    %205 = vmatpush1.msra.mxu0 %v181
    %206 = vmatprep.subr.mxu0 0.0
    %207 = vmatpush1.msra.mxu0 %v182
    %208 = vmatprep.subr.mxu0 0.0
    %209 = vmatpush1.msra.mxu0 %v183
    %210 = vmatprep.subr.mxu0 0.0
    %211 = vmatpush1.msra.mxu0 %v184
    %212 = vmatprep.subr.mxu0 0.0
    %213 = vmatpush1.msra.mxu0 %v185
    %214 = vmatprep.subr.mxu0 0.0
    %215 = vmatpush1.msra.mxu0 %v186
    %216 = vmatprep.subr.mxu0 0.0
    %217 = vmatpush1.msra.mxu0 %v187
    %218 = vmatprep.subr.mxu0 0.0
    %219 = vmatpush1.msra.mxu0 %v188
    %220 = vmatprep.subr.mxu0 0.0
    %221 = vmatpush1.msra.mxu0 %v189
    %222 = vmatprep.subr.mxu0 0.0
    %223 = vmatpush1.msra.mxu0 %v190
    %224 = vmatprep.subr.mxu0 0.0
    %225 = vmatpush1.msra.mxu0 %v191
    %226 = vmatprep.subr.mxu0 0.0
    %227 = vmatpush1.msra.mxu0 %v192
    %228 = vmatprep.subr.mxu0 0.0
    %229 = vmatpush1.msra.mxu0 %v193
    %230 = vmatprep.subr.mxu0 0.0
    %231 = vmatpush1.msra.mxu0 %v194
    %232 = vmatprep.subr.mxu0 0.0
    %233 = vmatpush1.msra.mxu0 0.0
    %234 = vmatprep.subr.mxu0 0.0
    %235 = vmatpush1.msra.mxu0 0.0
    %236 = vmatprep.subr.mxu0 0.0
    %237 = vmatpush1.msra.mxu0 0.0
    %238 = vmatprep.subr.mxu0 0.0
    %239 = vmatpush1.msra.mxu0 0.0
    %240 = vmatprep.subr.mxu0 0.0
    %241 = vmatpush1.msra.mxu0 0.0
    %242 = vmatprep.subr.mxu0 0.0
    %243 = vmatpush1.msra.mxu0 0.0
    %244 = vmatprep.subr.mxu0 0.0
    %245 = vmatpush1.msra.mxu0 0.0
    %246 = vmatprep.subr.mxu0 0.0
    %247 = vmatpush1.msra.mxu0 0.0
    %248 = vmatprep.subr.mxu0 0.0
    %249 = vmatpush1.msra.mxu0 0.0
    %250 = vmatprep.subr.mxu0 0.0
    %251 = vmatpush1.msra.mxu0 0.0
    %252 = vmatprep.subr.mxu0 0.0
    %253 = vmatpush1.msra.mxu0 0.0
    %254 = vmatprep.subr.mxu0 0.0
    %255 = vmatpush1.msra.mxu0 0.0
    %256 = vmatprep.subr.mxu0 0.0
    %257 = vmatpush1.msra.mxu0 0.0
    %258 = vmatprep.subr.mxu0 0.0
    %259 = vmatpush1.msra.mxu0 0.0
    %260 = vmatprep.subr.mxu0 0.0
    %261 = vmatpush1.msra.mxu0 0.0
    %262 = vmatprep.subr.mxu0 0.0
    %263 = vmatpush1.msra.mxu0 0.0
    %264 = vmatprep.mubr.f32.mxu0 0.0
    %265 = vmatmul.mubr.f32.gmra.mrb[0].mxu0 %v178
    %v266 = vpop.f32.mrb[0].mxu0
    %v267 = vadd.f32 %v199, %v266
    %v268 = vpop.f32.mrb[0].mxu0
    %269 = vdwg.mxu0
    %v270 = vmax.f32 %v267, 0.0
    %v271 = vld [vmem:[#allocation7 + $0x110] sm:$0xff]
    %v272 = vld [vmem:[#allocation7 + $0x118] sm:$0xff]
    %v273 = vld [vmem:[#allocation7 + $0x120] sm:$0xff]
    %v274 = vld [vmem:[#allocation7 + $0x128] sm:$0xff]
    %v275 = vld [vmem:[#allocation7 + $0x130] sm:$0xff]
    %v276 = vld [vmem:[#allocation7 + $0x138] sm:$0xff]
    %v277 = vld [vmem:[#allocation7 + $0x140] sm:$0xff]
    %v278 = vld [vmem:[#allocation7 + $0x148] sm:$0xff]
    %v279 = vld [vmem:[#allocation7 + $0x150] sm:$0xff]
    %v280 = vld [vmem:[#allocation7 + $0x158] sm:$0xff]
    %v281 = vld [vmem:[#allocation7 + $0x160] sm:$0xff]
    %v282 = vld [vmem:[#allocation7 + $0x168] sm:$0xff]
    %v283 = vld [vmem:[#allocation7 + $0x170] sm:$0xff]
    %v284 = vld [vmem:[#allocation7 + $0x178] sm:$0xff]
    %v285 = vld [vmem:[#allocation7 + $0x180] sm:$0xff]
    %v286 = vld [vmem:[#allocation7 + $0x188] sm:$0xff]
    %v287 = vld [vmem:[#allocation7 + $0x190] sm:$0x1]
    %v288 = vlaneseq
    %v289 = vshrl.u32 %v288, 7
    %v290 = vsub.s32 0, %v289
    %v291 = vrot.slane %v287, %v290
    %292 = vmatprep.subr.mxu0 0.0
    %293 = vmatpush1.msra.mxu0 %v271
    %294 = vmatprep.subr.mxu0 0.0
    %295 = vmatpush1.msra.mxu0 %v272
    %296 = vmatprep.subr.mxu0 0.0
    %297 = vmatpush1.msra.mxu0 %v273
    %298 = vmatprep.subr.mxu0 0.0
    %299 = vmatpush1.msra.mxu0 %v274
    %300 = vmatprep.subr.mxu0 0.0
    %301 = vmatpush1.msra.mxu0 %v275
    %302 = vmatprep.subr.mxu0 0.0
    %303 = vmatpush1.msra.mxu0 %v276
    %304 = vmatprep.subr.mxu0 0.0
    %305 = vmatpush1.msra.mxu0 %v277
    %306 = vmatprep.subr.mxu0 0.0
    %307 = vmatpush1.msra.mxu0 %v278
    %308 = vmatprep.subr.mxu0 0.0
    %309 = vmatpush1.msra.mxu0 %v279
    %310 = vmatprep.subr.mxu0 0.0
    %311 = vmatpush1.msra.mxu0 %v280
    %312 = vmatprep.subr.mxu0 0.0
    %313 = vmatpush1.msra.mxu0 %v281
    %314 = vmatprep.subr.mxu0 0.0
    %315 = vmatpush1.msra.mxu0 %v282
    %316 = vmatprep.subr.mxu0 0.0
    %317 = vmatpush1.msra.mxu0 %v283
    %318 = vmatprep.subr.mxu0 0.0
    %319 = vmatpush1.msra.mxu0 %v284
    %320 = vmatprep.subr.mxu0 0.0
    %321 = vmatpush1.msra.mxu0 %v285
    %322 = vmatprep.subr.mxu0 0.0
    %323 = vmatpush1.msra.mxu0 %v286
    %324 = vmatprep.subr.mxu0 0.0
    %325 = vmatpush1.msra.mxu0 0.0
    %326 = vmatprep.subr.mxu0 0.0
    %327 = vmatpush1.msra.mxu0 0.0
    %328 = vmatprep.subr.mxu0 0.0
    %329 = vmatpush1.msra.mxu0 0.0
    %330 = vmatprep.subr.mxu0 0.0
    %331 = vmatpush1.msra.mxu0 0.0
    %332 = vmatprep.subr.mxu0 0.0
    %333 = vmatpush1.msra.mxu0 0.0
    %334 = vmatprep.subr.mxu0 0.0
    %335 = vmatpush1.msra.mxu0 0.0
    %336 = vmatprep.subr.mxu0 0.0
    %337 = vmatpush1.msra.mxu0 0.0
    %338 = vmatprep.subr.mxu0 0.0
    %339 = vmatpush1.msra.mxu0 0.0
    %340 = vmatprep.subr.mxu0 0.0
    %341 = vmatpush1.msra.mxu0 0.0
    %342 = vmatprep.subr.mxu0 0.0
    %343 = vmatpush1.msra.mxu0 0.0
    %344 = vmatprep.subr.mxu0 0.0
    %345 = vmatpush1.msra.mxu0 0.0
    %346 = vmatprep.subr.mxu0 0.0
    %347 = vmatpush1.msra.mxu0 0.0
    %348 = vmatprep.subr.mxu0 0.0
    %349 = vmatpush1.msra.mxu0 0.0
    %350 = vmatprep.subr.mxu0 0.0
    %351 = vmatpush1.msra.mxu0 0.0
    %352 = vmatprep.subr.mxu0 0.0
    %353 = vmatpush1.msra.mxu0 0.0
    %354 = vmatprep.subr.mxu0 0.0
    %355 = vmatpush1.msra.mxu0 0.0
    %356 = vmatprep.mubr.f32.mxu0 0.0
    %357 = vmatmul.mubr.f32.gmra.mrb[0].mxu0 %v270
    %v358 = vpop.f32.mrb[0].mxu0
    %v359 = vadd.f32 %v291, %v358
    %v360 = vpop.f32.mrb[0].mxu0
    %361 = vdwg.mxu0
    %v362 = vld [vmem:[#allocation7 + $0x198] sm:$0xff]
    %v363 = vld [vmem:[#allocation7 + $0x1a0] sm:$0xff]
    %v364 = vld [vmem:[#allocation7 + $0x1a8] sm:$0xff]
    %v365 = vld [vmem:[#allocation7 + $0x1b0] sm:$0xff]
    %v366 = vld [vmem:[#allocation7 + $0x1b8] sm:$0xff]
    %v367 = vld [vmem:[#allocation7 + $0x1c0] sm:$0xff]
    %v368 = vld [vmem:[#allocation7 + $0x1c8] sm:$0xff]
    %v369 = vld [vmem:[#allocation7 + $0x1d0] sm:$0xff]
    %v370 = vld [vmem:[#allocation7 + $0x1d8] sm:$0xff]
    %v371 = vld [vmem:[#allocation7 + $0x1e0] sm:$0xff]
    %v372 = vld [vmem:[#allocation7 + $0x1e8] sm:$0xff]
    %v373 = vld [vmem:[#allocation7 + $0x1f0] sm:$0xff]
    %v374 = vld [vmem:[#allocation7 + $0x1f8] sm:$0xff]
    %v375 = vld [vmem:[#allocation7 + $0x200] sm:$0xff]
    %v376 = vld [vmem:[#allocation7 + $0x208] sm:$0xff]
    %v377 = vld [vmem:[#allocation7 + $0x210] sm:$0xff]
    %v378 = vld [vmem:[#allocation7 + $0x218] sm:$0x1]
    %v379 = vlaneseq
    %v380 = vshrl.u32 %v379, 7
    %v381 = vsub.s32 0, %v380
    %v382 = vrot.slane %v378, %v381
    %383 = vmatprep.subr.mxu0 0.0
    %384 = vmatpush1.msra.mxu0 %v362
    %385 = vmatprep.subr.mxu0 0.0
    %386 = vmatpush1.msra.mxu0 %v363
    %387 = vmatprep.subr.mxu0 0.0
    %388 = vmatpush1.msra.mxu0 %v364
    %389 = vmatprep.subr.mxu0 0.0
    %390 = vmatpush1.msra.mxu0 %v365
    %391 = vmatprep.subr.mxu0 0.0
    %392 = vmatpush1.msra.mxu0 %v366
    %393 = vmatprep.subr.mxu0 0.0
    %394 = vmatpush1.msra.mxu0 %v367
    %395 = vmatprep.subr.mxu0 0.0
    %396 = vmatpush1.msra.mxu0 %v368
    %397 = vmatprep.subr.mxu0 0.0
    %398 = vmatpush1.msra.mxu0 %v369
    %399 = vmatprep.subr.mxu0 0.0
    %400 = vmatpush1.msra.mxu0 %v370
    %401 = vmatprep.subr.mxu0 0.0
    %402 = vmatpush1.msra.mxu0 %v371
    %403 = vmatprep.subr.mxu0 0.0
    %404 = vmatpush1.msra.mxu0 %v372
    %405 = vmatprep.subr.mxu0 0.0
    %406 = vmatpush1.msra.mxu0 %v373
    %407 = vmatprep.subr.mxu0 0.0
    %408 = vmatpush1.msra.mxu0 %v374
    %409 = vmatprep.subr.mxu0 0.0
    %410 = vmatpush1.msra.mxu0 %v375
    %411 = vmatprep.subr.mxu0 0.0
    %412 = vmatpush1.msra.mxu0 %v376
    %413 = vmatprep.subr.mxu0 0.0
    %414 = vmatpush1.msra.mxu0 %v377
    %415 = vmatprep.subr.mxu0 0.0
    %416 = vmatpush1.msra.mxu0 0.0
    %417 = vmatprep.subr.mxu0 0.0
    %418 = vmatpush1.msra.mxu0 0.0
    %419 = vmatprep.subr.mxu0 0.0
    %420 = vmatpush1.msra.mxu0 0.0
    %421 = vmatprep.subr.mxu0 0.0
    %422 = vmatpush1.msra.mxu0 0.0
    %423 = vmatprep.subr.mxu0 0.0
    %424 = vmatpush1.msra.mxu0 0.0
    %425 = vmatprep.subr.mxu0 0.0
    %426 = vmatpush1.msra.mxu0 0.0
    %427 = vmatprep.subr.mxu0 0.0
    %428 = vmatpush1.msra.mxu0 0.0
    %429 = vmatprep.subr.mxu0 0.0
    %430 = vmatpush1.msra.mxu0 0.0
    %431 = vmatprep.subr.mxu0 0.0
    %432 = vmatpush1.msra.mxu0 0.0
    %433 = vmatprep.subr.mxu0 0.0
    %434 = vmatpush1.msra.mxu0 0.0
    %435 = vmatprep.subr.mxu0 0.0
    %436 = vmatpush1.msra.mxu0 0.0
    %437 = vmatprep.subr.mxu0 0.0
    %438 = vmatpush1.msra.mxu0 0.0
    %439 = vmatprep.subr.mxu0 0.0
    %440 = vmatpush1.msra.mxu0 0.0
    %441 = vmatprep.subr.mxu0 0.0
    %442 = vmatpush1.msra.mxu0 0.0
    %443 = vmatprep.subr.mxu0 0.0
    %444 = vmatpush1.msra.mxu0 0.0
    %445 = vmatprep.subr.mxu0 0.0
    %446 = vmatpush1.msra.mxu0 0.0
    %447 = vmatprep.mubr.f32.mxu0 0.0
    %448 = vmatmul.mubr.f32.gmra.mrb[0].mxu0 %v359
    %v449 = vpop.f32.mrb[0].mxu0
    %v450 = vadd.f32 %v382, %v449
    %v451 = vpop.f32.mrb[0].mxu0
    %452 = vdwg.mxu0
    %v453 = vmax.f32 %v450, 0.0
    %v454 = vld [vmem:[#allocation7 + $0x220] sm:$0xff]
    %v455 = vld [vmem:[#allocation7 + $0x228] sm:$0xff]
    %v456 = vld [vmem:[#allocation7 + $0x230] sm:$0xff]
    %v457 = vld [vmem:[#allocation7 + $0x238] sm:$0xff]
    %v458 = vld [vmem:[#allocation7 + $0x240] sm:$0xff]
    %v459 = vld [vmem:[#allocation7 + $0x248] sm:$0xff]
    %v460 = vld [vmem:[#allocation7 + $0x250] sm:$0xff]
    %v461 = vld [vmem:[#allocation7 + $0x258] sm:$0xff]
    %v462 = vld [vmem:[#allocation7 + $0x260] sm:$0xff]
    %v463 = vld [vmem:[#allocation7 + $0x268] sm:$0xff]
    %v464 = vld [vmem:[#allocation7 + $0x270] sm:$0xff]
    %v465 = vld [vmem:[#allocation7 + $0x278] sm:$0xff]
    %v466 = vld [vmem:[#allocation7 + $0x280] sm:$0xff]
    %v467 = vld [vmem:[#allocation7 + $0x288] sm:$0xff]
    %v468 = vld [vmem:[#allocation7 + $0x290] sm:$0xff]
    %v469 = vld [vmem:[#allocation7 + $0x298] sm:$0xff]
    %v470 = vld [vmem:[#allocation7 + $0x2a0] sm:$0x1]
    %v471 = vlaneseq
    %v472 = vshrl.u32 %v471, 7
    %v473 = vsub.s32 0, %v472
    %v474 = vrot.slane %v470, %v473
    %475 = vmatprep.subr.mxu0 0.0
    %476 = vmatpush1.msra.mxu0 %v454
    %477 = vmatprep.subr.mxu0 0.0
    %478 = vmatpush1.msra.mxu0 %v455
    %479 = vmatprep.subr.mxu0 0.0
    %480 = vmatpush1.msra.mxu0 %v456
    %481 = vmatprep.subr.mxu0 0.0
    %482 = vmatpush1.msra.mxu0 %v457
    %483 = vmatprep.subr.mxu0 0.0
    %484 = vmatpush1.msra.mxu0 %v458
    %485 = vmatprep.subr.mxu0 0.0
    %486 = vmatpush1.msra.mxu0 %v459
    %487 = vmatprep.subr.mxu0 0.0
    %488 = vmatpush1.msra.mxu0 %v460
    %489 = vmatprep.subr.mxu0 0.0
    %490 = vmatpush1.msra.mxu0 %v461
    %491 = vmatprep.subr.mxu0 0.0
    %492 = vmatpush1.msra.mxu0 %v462
    %493 = vmatprep.subr.mxu0 0.0
    %494 = vmatpush1.msra.mxu0 %v463
    %495 = vmatprep.subr.mxu0 0.0
    %496 = vmatpush1.msra.mxu0 %v464
    %497 = vmatprep.subr.mxu0 0.0
    %498 = vmatpush1.msra.mxu0 %v465
    %499 = vmatprep.subr.mxu0 0.0
    %500 = vmatpush1.msra.mxu0 %v466
    %501 = vmatprep.subr.mxu0 0.0
    %502 = vmatpush1.msra.mxu0 %v467
    %503 = vmatprep.subr.mxu0 0.0
    %504 = vmatpush1.msra.mxu0 %v468
    %505 = vmatprep.subr.mxu0 0.0
    %506 = vmatpush1.msra.mxu0 %v469
    %507 = vmatprep.subr.mxu0 0.0
    %508 = vmatpush1.msra.mxu0 0.0
    %509 = vmatprep.subr.mxu0 0.0
    %510 = vmatpush1.msra.mxu0 0.0
    %511 = vmatprep.subr.mxu0 0.0
    %512 = vmatpush1.msra.mxu0 0.0
    %513 = vmatprep.subr.mxu0 0.0
    %514 = vmatpush1.msra.mxu0 0.0
    %515 = vmatprep.subr.mxu0 0.0
    %516 = vmatpush1.msra.mxu0 0.0
    %517 = vmatprep.subr.mxu0 0.0
    %518 = vmatpush1.msra.mxu0 0.0
    %519 = vmatprep.subr.mxu0 0.0
    %520 = vmatpush1.msra.mxu0 0.0
    %521 = vmatprep.subr.mxu0 0.0
    %522 = vmatpush1.msra.mxu0 0.0
    %523 = vmatprep.subr.mxu0 0.0
    %524 = vmatpush1.msra.mxu0 0.0
    %525 = vmatprep.subr.mxu0 0.0
    %526 = vmatpush1.msra.mxu0 0.0
    %527 = vmatprep.subr.mxu0 0.0
    %528 = vmatpush1.msra.mxu0 0.0
    %529 = vmatprep.subr.mxu0 0.0
    %530 = vmatpush1.msra.mxu0 0.0
    %531 = vmatprep.subr.mxu0 0.0
    %532 = vmatpush1.msra.mxu0 0.0
    %533 = vmatprep.subr.mxu0 0.0
    %534 = vmatpush1.msra.mxu0 0.0
    %535 = vmatprep.subr.mxu0 0.0
    %536 = vmatpush1.msra.mxu0 0.0
    %537 = vmatprep.subr.mxu0 0.0
    %538 = vmatpush1.msra.mxu0 0.0
    %539 = vmatprep.mubr.f32.mxu0 0.0
    %540 = vmatmul.mubr.f32.gmra.mrb[0].mxu0 %v453
    %v541 = vpop.f32.mrb[0].mxu0
    %v542 = vadd.f32 %v474, %v541
    %v543 = vpop.f32.mrb[0].mxu0
    %544 = vdwg.mxu0
    %v545 = vmax.f32 %v542, 0.0
    %v546 = vld [vmem:[#allocation7 + $0x2a8] sm:$0xff]
    %v547 = vld [vmem:[#allocation7 + $0x2b0] sm:$0xff]
    %v548 = vld [vmem:[#allocation7 + $0x2b8] sm:$0xff]
    %v549 = vld [vmem:[#allocation7 + $0x2c0] sm:$0xff]
    %v550 = vld [vmem:[#allocation7 + $0x2c8] sm:$0xff]
    %v551 = vld [vmem:[#allocation7 + $0x2d0] sm:$0xff]
    %v552 = vld [vmem:[#allocation7 + $0x2d8] sm:$0xff]
    %v553 = vld [vmem:[#allocation7 + $0x2e0] sm:$0xff]
    %v554 = vld [vmem:[#allocation7 + $0x2e8] sm:$0xff]
    %v555 = vld [vmem:[#allocation7 + $0x2f0] sm:$0xff]
    %v556 = vld [vmem:[#allocation7 + $0x2f8] sm:$0xff]
    %v557 = vld [vmem:[#allocation7 + $0x300] sm:$0xff]
    %v558 = vld [vmem:[#allocation7 + $0x308] sm:$0xff]
    %v559 = vld [vmem:[#allocation7 + $0x310] sm:$0xff]
    %v560 = vld [vmem:[#allocation7 + $0x318] sm:$0xff]
    %v561 = vld [vmem:[#allocation7 + $0x320] sm:$0xff]
    %v562 = vld [vmem:[#allocation7 + $0x328] sm:$0x1]
    %v563 = vlaneseq
    %v564 = vshrl.u32 %v563, 7
    %v565 = vsub.s32 0, %v564
    %v566 = vrot.slane %v562, %v565
    %567 = vmatprep.subr.mxu0 0.0
    %568 = vmatpush1.msra.mxu0 %v546
    %569 = vmatprep.subr.mxu0 0.0
    %570 = vmatpush1.msra.mxu0 %v547
    %571 = vmatprep.subr.mxu0 0.0
    %572 = vmatpush1.msra.mxu0 %v548
    %573 = vmatprep.subr.mxu0 0.0
    %574 = vmatpush1.msra.mxu0 %v549
    %575 = vmatprep.subr.mxu0 0.0
    %576 = vmatpush1.msra.mxu0 %v550
    %577 = vmatprep.subr.mxu0 0.0
    %578 = vmatpush1.msra.mxu0 %v551
    %579 = vmatprep.subr.mxu0 0.0
    %580 = vmatpush1.msra.mxu0 %v552
    %581 = vmatprep.subr.mxu0 0.0
    %582 = vmatpush1.msra.mxu0 %v553
    %583 = vmatprep.subr.mxu0 0.0
    %584 = vmatpush1.msra.mxu0 %v554
    %585 = vmatprep.subr.mxu0 0.0
    %586 = vmatpush1.msra.mxu0 %v555
    %587 = vmatprep.subr.mxu0 0.0
    %588 = vmatpush1.msra.mxu0 %v556
    %589 = vmatprep.subr.mxu0 0.0
    %590 = vmatpush1.msra.mxu0 %v557
    %591 = vmatprep.subr.mxu0 0.0
    %592 = vmatpush1.msra.mxu0 %v558
    %593 = vmatprep.subr.mxu0 0.0
    %594 = vmatpush1.msra.mxu0 %v559
    %595 = vmatprep.subr.mxu0 0.0
    %596 = vmatpush1.msra.mxu0 %v560
    %597 = vmatprep.subr.mxu0 0.0
    %598 = vmatpush1.msra.mxu0 %v561
    %599 = vmatprep.subr.mxu0 0.0
    %600 = vmatpush1.msra.mxu0 0.0
    %601 = vmatprep.subr.mxu0 0.0
    %602 = vmatpush1.msra.mxu0 0.0
    %603 = vmatprep.subr.mxu0 0.0
    %604 = vmatpush1.msra.mxu0 0.0
    %605 = vmatprep.subr.mxu0 0.0
    %606 = vmatpush1.msra.mxu0 0.0
    %607 = vmatprep.subr.mxu0 0.0
    %608 = vmatpush1.msra.mxu0 0.0
    %609 = vmatprep.subr.mxu0 0.0
    %610 = vmatpush1.msra.mxu0 0.0
    %611 = vmatprep.subr.mxu0 0.0
    %612 = vmatpush1.msra.mxu0 0.0
    %613 = vmatprep.subr.mxu0 0.0
    %614 = vmatpush1.msra.mxu0 0.0
    %615 = vmatprep.subr.mxu0 0.0
    %616 = vmatpush1.msra.mxu0 0.0
    %617 = vmatprep.subr.mxu0 0.0
    %618 = vmatpush1.msra.mxu0 0.0
    %619 = vmatprep.subr.mxu0 0.0
    %620 = vmatpush1.msra.mxu0 0.0
    %621 = vmatprep.subr.mxu0 0.0
    %622 = vmatpush1.msra.mxu0 0.0
    %623 = vmatprep.subr.mxu0 0.0
    %624 = vmatpush1.msra.mxu0 0.0
    %625 = vmatprep.subr.mxu0 0.0
    %626 = vmatpush1.msra.mxu0 0.0
    %627 = vmatprep.subr.mxu0 0.0
    %628 = vmatpush1.msra.mxu0 0.0
    %629 = vmatprep.subr.mxu0 0.0
    %630 = vmatpush1.msra.mxu0 0.0
    %631 = vmatprep.mubr.f32.mxu0 0.0
    %632 = vmatmul.mubr.f32.gmra.mrb[0].mxu0 %v545
    %v633 = vpop.f32.mrb[0].mxu0
    %v634 = vadd.f32 %v566, %v633
    %v635 = vpop.f32.mrb[0].mxu0
    %636 = vdwg.mxu0
    %v637 = vmax.f32 %v634, 0.0
    %v638 = vld [vmem:[#allocation7 + $0x330] sm:$0xff]
    %v639 = vld [vmem:[#allocation7 + $0x338] sm:$0xff]
    %v640 = vld [vmem:[#allocation7 + $0x340] sm:$0xff]
    %v641 = vld [vmem:[#allocation7 + $0x348] sm:$0xff]
    %v642 = vld [vmem:[#allocation7 + $0x350] sm:$0xff]
    %v643 = vld [vmem:[#allocation7 + $0x358] sm:$0xff]
    %v644 = vld [vmem:[#allocation7 + $0x360] sm:$0xff]
    %v645 = vld [vmem:[#allocation7 + $0x368] sm:$0xff]
    %v646 = vld [vmem:[#allocation7 + $0x370] sm:$0xff]
    %v647 = vld [vmem:[#allocation7 + $0x378] sm:$0xff]
    %v648 = vld [vmem:[#allocation7 + $0x380] sm:$0xff]
    %v649 = vld [vmem:[#allocation7 + $0x388] sm:$0xff]
    %v650 = vld [vmem:[#allocation7 + $0x390] sm:$0xff]
    %v651 = vld [vmem:[#allocation7 + $0x398] sm:$0xff]
    %v652 = vld [vmem:[#allocation7 + $0x3a0] sm:$0xff]
    %v653 = vld [vmem:[#allocation7 + $0x3a8] sm:$0xff]
    %v654 = vld [vmem:[#allocation7 + $0x3b0] sm:$0x1]
    %v655 = vlaneseq
    %v656 = vshrl.u32 %v655, 7
    %v657 = vsub.s32 0, %v656
    %v658 = vrot.slane %v654, %v657
    %659 = vmatprep.subr.mxu0 0.0
    %660 = vmatpush1.msra.mxu0 %v638
    %661 = vmatprep.subr.mxu0 0.0
    %662 = vmatpush1.msra.mxu0 %v639
    %663 = vmatprep.subr.mxu0 0.0
    %664 = vmatpush1.msra.mxu0 %v640
    %665 = vmatprep.subr.mxu0 0.0
    %666 = vmatpush1.msra.mxu0 %v641
    %667 = vmatprep.subr.mxu0 0.0
    %668 = vmatpush1.msra.mxu0 %v642
    %669 = vmatprep.subr.mxu0 0.0
    %670 = vmatpush1.msra.mxu0 %v643
    %671 = vmatprep.subr.mxu0 0.0
    %672 = vmatpush1.msra.mxu0 %v644
    %673 = vmatprep.subr.mxu0 0.0
    %674 = vmatpush1.msra.mxu0 %v645
    %675 = vmatprep.subr.mxu0 0.0
    %676 = vmatpush1.msra.mxu0 %v646
    %677 = vmatprep.subr.mxu0 0.0
    %678 = vmatpush1.msra.mxu0 %v647
    %679 = vmatprep.subr.mxu0 0.0
    %680 = vmatpush1.msra.mxu0 %v648
    %681 = vmatprep.subr.mxu0 0.0
    %682 = vmatpush1.msra.mxu0 %v649
    %683 = vmatprep.subr.mxu0 0.0
    %684 = vmatpush1.msra.mxu0 %v650
    %685 = vmatprep.subr.mxu0 0.0
    %686 = vmatpush1.msra.mxu0 %v651
    %687 = vmatprep.subr.mxu0 0.0
    %688 = vmatpush1.msra.mxu0 %v652
    %689 = vmatprep.subr.mxu0 0.0
    %690 = vmatpush1.msra.mxu0 %v653
    %691 = vmatprep.subr.mxu0 0.0
    %692 = vmatpush1.msra.mxu0 0.0
    %693 = vmatprep.subr.mxu0 0.0
    %694 = vmatpush1.msra.mxu0 0.0
    %695 = vmatprep.subr.mxu0 0.0
    %696 = vmatpush1.msra.mxu0 0.0
    %697 = vmatprep.subr.mxu0 0.0
    %698 = vmatpush1.msra.mxu0 0.0
    %699 = vmatprep.subr.mxu0 0.0
    %700 = vmatpush1.msra.mxu0 0.0
    %701 = vmatprep.subr.mxu0 0.0
    %702 = vmatpush1.msra.mxu0 0.0
    %703 = vmatprep.subr.mxu0 0.0
    %704 = vmatpush1.msra.mxu0 0.0
    %705 = vmatprep.subr.mxu0 0.0
    %706 = vmatpush1.msra.mxu0 0.0
    %707 = vmatprep.subr.mxu0 0.0
    %708 = vmatpush1.msra.mxu0 0.0
    %709 = vmatprep.subr.mxu0 0.0
    %710 = vmatpush1.msra.mxu0 0.0
    %711 = vmatprep.subr.mxu0 0.0
    %712 = vmatpush1.msra.mxu0 0.0
    %713 = vmatprep.subr.mxu0 0.0
    %714 = vmatpush1.msra.mxu0 0.0
    %715 = vmatprep.subr.mxu0 0.0
    %716 = vmatpush1.msra.mxu0 0.0
    %717 = vmatprep.subr.mxu0 0.0
    %718 = vmatpush1.msra.mxu0 0.0
    %719 = vmatprep.subr.mxu0 0.0
    %720 = vmatpush1.msra.mxu0 0.0
    %721 = vmatprep.subr.mxu0 0.0
    %722 = vmatpush1.msra.mxu0 0.0
    %723 = vmatprep.mubr.f32.mxu0 0.0
    %724 = vmatmul.mubr.f32.gmra.mrb[0].mxu0 %v637
    %v725 = vpop.f32.mrb[0].mxu0
    %v726 = vadd.f32 %v658, %v725
    %v727 = vpop.f32.mrb[0].mxu0
    %728 = vdwg.mxu0
    %729 = vst [vmem:[#allocation8] sm:$0xff] %v726
    // Predicated region
    $region26: #{tpu_custom_call.1} parent=1 // pred_check
      _
    $region27: #{tpu_custom_call.1} parent=1 // pred_check_branch
      %731 = sbr.rel (0) target = $region29
    $region28: #{tpu_custom_call.1} parent=1 // pred_region
      %s733 = ssub.s32 128, 128
      %734 = vsyncadd [#allocation4], %s733
      %s736 = sshll.u32 [#allocation8], 4
      %s737 = int_to_ptr.vmem [resolvable:$true] %s736
      %739 = dma.vmem_to_hbm [thread:$0]  %s737, 128, %s3, [#allocation4]
    $region29: #{tpu_custom_call.1} parent=1 // pred_fallthru
      _
    // Predicated region
    $region30: #{tpu_custom_call.1} parent=1 // pred_check
      _
    $region31: #{tpu_custom_call.1} parent=1 // pred_check_branch
      %741 = sbr.rel (0) target = $region33
    $region32: #{tpu_custom_call.1} parent=1 // pred_region
      %742 = dma.done [#allocation4], 128
    $region33: #{tpu_custom_call.1} parent=1 // pred_fallthru
      _
    %743 = vsyncpa [#allocation3], 1
    %744 = vsyncpa [#allocation6], 1
    %745 = vsyncpa [#allocation4], 1

</llo_original>
